<compile_context>
chip_gen: v7x
topology: tpu7x:2x2x1
jax: 0.10.0
libtpu: 0.0.40
codegen_flags: <defaults>
</compile_context>

<pallas_src>
import math

import jax
import jax.numpy as jnp
from jax.experimental import pallas as pl
from jax.experimental.pallas import tpu as pltpu

HIDDEN = 32
HIDDEN_PAD = 128          # hidden 32 -> 128 lanes (zero pad; exact under x*x)
LANE = 128
VMEM_BUDGET = 12 * 1024 * 1024   # conservative: below v5e's 16 MiB scoped default


def _round_up(n, m):
    return ((n + m - 1) // m) * m


def _vmem_bytes(tb, tk, o_pad):
    """Rough per-core VMEM footprint (f32, default double-buffering)."""
    x_b = 2 * tb * tk * 4                      # x tile, double-buffered
    out_b = 2 * tb * o_pad * 4                 # out tile, double-buffered
    w_b = 2 * (tk * HIDDEN_PAD + HIDDEN_PAD * o_pad + HIDDEN_PAD + o_pad) * 4
    acc_b = tb * HIDDEN_PAD * 4                # accumulator scratch
    return x_b + out_b + w_b + acc_b


def _choose_tb(batch, tb_max):
    """Batch tile: >=2 grid steps for v7x megacore when B is large, tiles >=256
    rows to amortize per-step overhead, multiple of 8 for sublane alignment."""
    if batch <= 256:
        return min(_round_up(batch, 8), 256)
    half = _round_up(pl.cdiv(batch, 2), 256)
    return min(tb_max, half)


def _choose_tk(d, tb, o_pad):
    """Feature (reduction) tile: whole D if it fits VMEM, else the largest
    multiple-of-128 divisor of D that fits (so no ragged K block ever mixes
    garbage into the accumulation)."""
    if _vmem_bytes(tb, d, o_pad) <= VMEM_BUDGET:
        return d
    best = None
    for tk in range(LANE, d, LANE):
        if d % tk == 0 and _vmem_bytes(tb, tk, o_pad) <= VMEM_BUDGET:
            best = tk
    if best is not None:
        return best
    # TODO(synk): ragged-K tiling (masked partial K block) for huge D with no
    # suitable multiple-of-128 divisor; fall back to whole-D + raised VMEM limit.
    return d


def mlp_kernel(x_ref, w1_ref, b1_ref, w2_ref, b2_ref, o_ref, acc_ref):
    k = pl.program_id(1)

    @pl.when(k == 0)
    def _init():
        acc_ref[...] = jnp.zeros_like(acc_ref)

    # hidden partial: (TB, TK) @ (TK, 128) -> accumulate in f32
    acc_ref[...] += jnp.dot(x_ref[...], w1_ref[...],
                            preferred_element_type=jnp.float32)

    @pl.when(k == pl.num_programs(1) - 1)
    def _finalize():
        h = acc_ref[...] + b1_ref[...]
        h = h * h                                     # nonlinearity: x * x
        y = jnp.dot(h, w2_ref[...], preferred_element_type=jnp.float32)
        o_ref[...] = (y + b2_ref[...]).astype(o_ref.dtype)


def prepare_params(w1, b1, w2, b2):
    """One-time prep: transpose to row-major matmul layout and zero-pad the
    hidden (32->128) and output (O->round_up(O,128)) dims for lane-dense tiles.

    w1: (32, D), b1: (32,), w2: (O, 32), b2: (O,)
    returns w1_p (D, 128), b1_p (1, 128), w2_p (128, O_pad), b2_p (1, O_pad), O
    """
    D = w1.shape[1]
    O = w2.shape[0]
    O_pad = _round_up(O, LANE)

    w1_p = jnp.zeros((D, HIDDEN_PAD), jnp.float32).at[:, :HIDDEN].set(w1.T)
    b1_p = jnp.zeros((1, HIDDEN_PAD), jnp.float32).at[0, :HIDDEN].set(b1)
    w2_p = jnp.zeros((HIDDEN_PAD, O_pad), jnp.float32).at[:HIDDEN, :O].set(w2.T)
    b2_p = jnp.zeros((1, O_pad), jnp.float32).at[0, :O].set(b2)
    return w1_p, b1_p, w2_p, b2_p, O


def mlp_forward(x, w1_p, b1_p, w2_p, b2_p, output_dim, tb=1024):
    """x: (B, ...) float32. Params already prepared by prepare_params()."""
    B = x.shape[0]
    D = math.prod(x.shape[1:])
    O_pad = w2_p.shape[1]

    x_flat = x.reshape(B, D)        # same as torch .view(B, -1); no padding copy

    tb_eff = _choose_tb(B, tb)
    tk = _choose_tk(D, tb_eff, O_pad)
    nb = pl.cdiv(B, tb_eff)
    nk = pl.cdiv(D, tk)             # tk divides D exactly unless tk == D

    vmem_needed = _vmem_bytes(tb_eff, tk, O_pad)
    vmem_limit = None
    if vmem_needed > VMEM_BUDGET:   # whole-D fallback for awkward D
        vmem_limit = min(_round_up(vmem_needed, 1 << 20) + (2 << 20), 64 << 20)

    cost = pl.CostEstimate(
        flops=2 * B * D * HIDDEN_PAD + 2 * B * HIDDEN_PAD * O_pad,
        transcendentals=0,
        bytes_accessed=(B * D + D * HIDDEN_PAD + HIDDEN_PAD * O_pad + B * O_pad) * 4,
    )

    out = pl.pallas_call(
        mlp_kernel,
        out_shape=jax.ShapeDtypeStruct((B, O_pad), x.dtype),
        grid=(nb, nk),
        in_specs=[
            pl.BlockSpec((tb_eff, tk), lambda i, k: (i, k)),        # x tile
            pl.BlockSpec((tk, HIDDEN_PAD), lambda i, k: (k, 0)),    # W1 K-slab
            pl.BlockSpec(b1_p.shape, lambda i, k: (0, 0)),          # resident
            pl.BlockSpec(w2_p.shape, lambda i, k: (0, 0)),          # resident
            pl.BlockSpec(b2_p.shape, lambda i, k: (0, 0)),          # resident
        ],
        out_specs=pl.BlockSpec((tb_eff, O_pad), lambda i, k: (i, 0)),
        scratch_shapes=[pltpu.VMEM((tb_eff, HIDDEN_PAD), jnp.float32)],
        compiler_params=pltpu.CompilerParams(
            dimension_semantics=("parallel", "arbitrary"),
            vmem_limit_bytes=vmem_limit,
        ),
        cost_estimate=cost,
    )(x_flat, w1_p, b1_p, w2_p, b2_p)

    return out[:, :output_dim]


def init_params(key, input_dim, output_dim, hidden=HIDDEN):
    # Deterministic init mimicking nn.Linear default (uniform +- 1/sqrt(fan_in)).
    k1, k2, k3, k4 = jax.random.split(key, 4)
    lim1 = 1.0 / math.sqrt(input_dim)
    lim2 = 1.0 / math.sqrt(hidden)
    w1 = jax.random.uniform(k1, (hidden, input_dim), jnp.float32, -lim1, lim1)
    b1 = jax.random.uniform(k2, (hidden,), jnp.float32, -lim1, lim1)
    w2 = jax.random.uniform(k3, (output_dim, hidden), jnp.float32, -lim2, lim2)
    b2 = jax.random.uniform(k4, (output_dim,), jnp.float32, -lim2, lim2)
    return w1, b1, w2, b2


if __name__ == "__main__":
    key = jax.random.PRNGKey(0)
    k_x, k_p = jax.random.split(key)

    # Small shapes consistent with the module: x is flattened to (B, C*H*W).
    B, C, H, W = 2, 4, 16, 16
    input_dim = C * H * W          # 1024
    output_dim = 10

    x = jax.random.normal(k_x, (B, C, H, W), jnp.float32)
    w1, b1, w2, b2 = init_params(k_p, input_dim, output_dim)

    # One-time param prep (transpose + pad), kept out of the per-call path.
    w1_p, b1_p, w2_p, b2_p, O = prepare_params(w1, b1, w2, b2)

    y = mlp_forward(x, w1_p, b1_p, w2_p, b2_p, O)
    y = jax.block_until_ready(y)

    # Pure-JAX reference for sanity (matches the PyTorch module exactly).
    x_flat = x.reshape(B, -1)
    h_ref = x_flat @ w1.T + b1
    h_ref = h_ref * h_ref
    y_ref = h_ref @ w2.T + b2
    assert y.shape == (B, output_dim)
    assert jnp.allclose(y, y_ref, atol=1e-4, rtol=1e-4)

    print("KERNEL_OK")
</pallas_src>

<mosaic_0001>
module attributes {stable_mosaic.version = 11 : i64} {
  func.func @mlp_kernel(%arg0: i32, %arg1: i32, %arg2: memref<8x1024xf32, #tpu.memory_space<vmem>>, %arg3: memref<1024x128xf32, #tpu.memory_space<vmem>>, %arg4: memref<1x128xf32, #tpu.memory_space<vmem>>, %arg5: memref<128x128xf32, #tpu.memory_space<vmem>>, %arg6: memref<1x128xf32, #tpu.memory_space<vmem>>, %arg7: memref<8x128xf32, #tpu.memory_space<vmem>>, %arg8: memref<8x128xf32, #tpu.memory_space<vmem>>) attributes {dimension_semantics = [#tpu.dimension_semantics<parallel>, #tpu.dimension_semantics<arbitrary>], iteration_bounds = array<i64: 1, 1>, scalar_prefetch = 0 : i64, scratch_operands = 1 : i64, tpu.core_type = #tpu.core_type<tc>, window_params = [{transform_indices = @transform_0, window_bounds = array<i64: 8, 1024>}, {transform_indices = @transform_1, window_bounds = array<i64: 1024, 128>}, {pipeline_mode = #tpu.pipeline_mode<synchronous>, transform_indices = @transform_2, window_bounds = array<i64: 1, 128>}, {pipeline_mode = #tpu.pipeline_mode<synchronous>, transform_indices = @transform_3, window_bounds = array<i64: 128, 128>}, {pipeline_mode = #tpu.pipeline_mode<synchronous>, transform_indices = @transform_4, window_bounds = array<i64: 1, 128>}, {transform_indices = @transform_5, window_bounds = array<i64: 8, 128>}]} {
    %c0_i32 = arith.constant 0 : i32
    %0 = arith.cmpi eq, %arg1, %c0_i32 : i32
    %1 = arith.extui %0 : i1 to i32
    %c0_i32_0 = arith.constant 0 : i32
    %2 = arith.cmpi ne, %1, %c0_i32_0 : i32
    scf.if %2 {
      %cst_10 = arith.constant 0.000000e+00 : f32
      %12 = vector.broadcast %cst_10 : f32 to vector<8x128xf32>
      %c0_11 = arith.constant 0 : index
      %c0_12 = arith.constant 0 : index
      %13 = vector.load %arg8[%c0_11, %c0_12] : memref<8x128xf32, #tpu.memory_space<vmem>>, vector<8x128xf32>
      tpu.vector_store %arg8[%c0_11, %c0_12], %12 {strides = array<i32>} : memref<8x128xf32, #tpu.memory_space<vmem>>, vector<8x128xf32>,
    } else {
    }
    %c0 = arith.constant 0 : index
    %c0_1 = arith.constant 0 : index
    %3 = vector.load %arg8[%c0, %c0_1] : memref<8x128xf32, #tpu.memory_space<vmem>>, vector<8x128xf32>
    %c0_2 = arith.constant 0 : index
    %c0_3 = arith.constant 0 : index
    %4 = vector.load %arg2[%c0_2, %c0_3] : memref<8x1024xf32, #tpu.memory_space<vmem>>, vector<8x1024xf32>
    %c0_4 = arith.constant 0 : index
    %c0_5 = arith.constant 0 : index
    %5 = vector.load %arg3[%c0_4, %c0_5] : memref<1024x128xf32, #tpu.memory_space<vmem>>, vector<1024x128xf32>
    %cst = arith.constant dense<0.000000e+00> : vector<8x128xf32>
    %6 = tpu.matmul %4, %5, %cst {dimension_numbers = #tpu.dot_dimension_numbers<[1], [0], [0], [1], [0, 0, 1, 1], [], []>} : vector<8x1024xf32>, vector<1024x128xf32>, vector<8x128xf32> -> vector<8x128xf32>
    %7 = arith.addf %3, %6 : vector<8x128xf32>
    %c0_6 = arith.constant 0 : index
    %c0_7 = arith.constant 0 : index
    %8 = vector.load %arg8[%c0_6, %c0_7] : memref<8x128xf32, #tpu.memory_space<vmem>>, vector<8x128xf32>
    tpu.vector_store %arg8[%c0_6, %c0_7], %7 {strides = array<i32>} : memref<8x128xf32, #tpu.memory_space<vmem>>, vector<8x128xf32>,
    %c0_i32_8 = arith.constant 0 : i32
    %9 = arith.cmpi eq, %arg1, %c0_i32_8 : i32
    %10 = arith.extui %9 : i1 to i32
    %c0_i32_9 = arith.constant 0 : i32
    %11 = arith.cmpi ne, %10, %c0_i32_9 : i32
    scf.if %11 {
      %c0_10 = arith.constant 0 : index
      %c0_11 = arith.constant 0 : index
      %12 = vector.load %arg8[%c0_10, %c0_11] : memref<8x128xf32, #tpu.memory_space<vmem>>, vector<8x128xf32>
      %c0_12 = arith.constant 0 : index
      %c0_13 = arith.constant 0 : index
      %13 = vector.load %arg4[%c0_12, %c0_13] : memref<1x128xf32, #tpu.memory_space<vmem>>, vector<1x128xf32>
      %14 = vector.broadcast %13 : vector<1x128xf32> to vector<8x128xf32>
      %15 = arith.addf %12, %14 : vector<8x128xf32>
      %16 = arith.mulf %15, %15 : vector<8x128xf32>
      %c0_14 = arith.constant 0 : index
      %c0_15 = arith.constant 0 : index
      %17 = vector.load %arg5[%c0_14, %c0_15] : memref<128x128xf32, #tpu.memory_space<vmem>>, vector<128x128xf32>
      %cst_16 = arith.constant dense<0.000000e+00> : vector<8x128xf32>
      %18 = tpu.matmul %16, %17, %cst_16 {dimension_numbers = #tpu.dot_dimension_numbers<[1], [0], [0], [1], [0, 0, 1, 1], [], []>} : vector<8x128xf32>, vector<128x128xf32>, vector<8x128xf32> -> vector<8x128xf32>
      %c0_17 = arith.constant 0 : index
      %c0_18 = arith.constant 0 : index
      %19 = vector.load %arg6[%c0_17, %c0_18] : memref<1x128xf32, #tpu.memory_space<vmem>>, vector<1x128xf32>
      %20 = vector.broadcast %19 : vector<1x128xf32> to vector<8x128xf32>
      %21 = arith.addf %18, %20 : vector<8x128xf32>
      %c0_19 = arith.constant 0 : index
      %c0_20 = arith.constant 0 : index
      %22 = vector.load %arg7[%c0_19, %c0_20] : memref<8x128xf32, #tpu.memory_space<vmem>>, vector<8x128xf32>
      tpu.vector_store %arg7[%c0_19, %c0_20], %21 {strides = array<i32>} : memref<8x128xf32, #tpu.memory_space<vmem>>, vector<8x128xf32>,
    } else {
    }
    return
  }
  func.func @transform_0(%arg0: i32, %arg1: i32) -> (i32, i32) {
    %c0_i32 = arith.constant 0 : i32
    return %arg0, %arg1 : i32, i32
  }
  func.func @transform_1(%arg0: i32, %arg1: i32) -> (i32, i32) {
    %c0_i32 = arith.constant 0 : i32
    %c0_i32_0 = arith.constant 0 : i32
    return %arg1, %c0_i32 : i32, i32
  }
  func.func @transform_2(%arg0: i32, %arg1: i32) -> (i32, i32) {
    %c0_i32 = arith.constant 0 : i32
    %c0_i32_0 = arith.constant 0 : i32
    %c0_i32_1 = arith.constant 0 : i32
    return %c0_i32, %c0_i32_0 : i32, i32
  }
  func.func @transform_3(%arg0: i32, %arg1: i32) -> (i32, i32) {
    %c0_i32 = arith.constant 0 : i32
    %c0_i32_0 = arith.constant 0 : i32
    %c0_i32_1 = arith.constant 0 : i32
    return %c0_i32, %c0_i32_0 : i32, i32
  }
  func.func @transform_4(%arg0: i32, %arg1: i32) -> (i32, i32) {
    %c0_i32 = arith.constant 0 : i32
    %c0_i32_0 = arith.constant 0 : i32
    %c0_i32_1 = arith.constant 0 : i32
    return %c0_i32, %c0_i32_0 : i32, i32
  }
  func.func @transform_5(%arg0: i32, %arg1: i32) -> (i32, i32) {
    %c0_i32 = arith.constant 0 : i32
    %c0_i32_0 = arith.constant 0 : i32
    return %arg0, %c0_i32 : i32, i32
  }
}

</mosaic_0001>

<llo_original>
// kernel: tpu_custom_call.1
$region0: #{tpu_custom_call.1}
  #allocation0 [shape = 'u32[]', space=smem, size = 0x4, offset = 0x4, fixed_abs, tag = 'smem constant byte address 0x4 - core index']
  #allocation1 [shape = 'u32[144,128]{1,0:T(1,128)}', space=vmem, size = 0x12000, scoped, tag = 'internal scratch']
  #allocation2 [shape = 'f32[8,128]{1,0:T(8,128)}', space=vmem, size = 0x1000, scoped, tag = 'scratch operand']
  %s0 = inlined_call_operand.hbm [shape: f32[2,1024], index: 0, kind: input, shape index: {}]
  %s1 = inlined_call_operand.hbm [shape: f32[1024,128], index: 1, kind: input, shape index: {}]
  %s2 = inlined_call_operand.vmem [shape: f32[1,128], index: 2, kind: input, shape index: {}]
  %s3 = inlined_call_operand.hbm [shape: f32[128,128], index: 3, kind: input, shape index: {}]
  %s4 = inlined_call_operand.vmem [shape: f32[1,128], index: 4, kind: input, shape index: {}]
  %s5 = inlined_call_operand.hbm [shape: f32[2,128], index: 5, kind: output, shape index: {}]
  %s6 = sld [smem:[#allocation0]]
  $region50: #{tpu_custom_call.1} parent=0
    _
  %s8 = ssub.s32 1, %s6
  %s9 = scalar_select 0, %s8, %s6
  $region1: #{tpu_custom_call.1} parent=0
    #allocation3 [shape = 'u8[32768]{0}', space=vmem, size = 0x8000, scoped, tag = 'input window, operand 0, single buffered']
    #allocation4 [shape = 's32[1]{0}', space=sflag, size = 0x4, scoped, tag = 'scoped memory for tpu_custom_call.1']
    #allocation5 [shape = 's32[1]{0}', space=sflag, size = 0x4, scoped, tag = 'scoped memory for tpu_custom_call.1']
    #allocation6 [shape = 'u8[524288]{0}', space=vmem, size = 0x80000, scoped, tag = 'input window, operand 1, single buffered']
    #allocation7 [shape = 's32[1]{0}', space=sflag, size = 0x4, scoped, tag = 'scoped memory for tpu_custom_call.1']
    #allocation8 [shape = 'u8[65536]{0}', space=vmem, size = 0x10000, scoped, tag = 'input window, operand 3, single buffered']
    #allocation9 [shape = 'u8[4096]{0}', space=vmem, size = 0x1000, scoped, tag = 'output window, operand 0, single buffered']
    %10 = vsyncpa [#allocation4], 0
    %11 = vsyncpa [#allocation7], 0
    %12 = vsyncpa [#allocation5], 0
    // Predicated region
    $region2: #{tpu_custom_call.1} parent=1 // pred_check
      _
    $region3: #{tpu_custom_call.1} parent=1 // pred_check_branch
      %14 = sbr.rel (0) target = $region5
    $region4: #{tpu_custom_call.1} parent=1 // pred_region
      %s16 = ssub.s32 1024, 256
      %17 = vsyncadd [#allocation4], %s16
      %s18 = sshll.u32 [#allocation3], 4
      %s19 = int_to_ptr.vmem [resolvable:$true] %s18
      %24 = dma.hbm_to_vmem [thread:$0]  %s0, 256, %s19, [#allocation4], 256, 256, 16
    $region5: #{tpu_custom_call.1} parent=1 // pred_fallthru
      _
    // Predicated region
    $region6: #{tpu_custom_call.1} parent=1 // pred_check
      _
    $region7: #{tpu_custom_call.1} parent=1 // pred_check_branch
      %26 = sbr.rel (0) target = $region9
    $region8: #{tpu_custom_call.1} parent=1 // pred_region
      %s28 = ssub.s32 16384, 16384
      %29 = vsyncadd [#allocation7], %s28
      %s30 = sshll.u32 [#allocation6], 4
      %s31 = int_to_ptr.vmem [resolvable:$true] %s30
      %36 = dma.hbm_to_vmem [thread:$0]  %s1, 16384, %s31, [#allocation7], 128, 128, 8
    $region9: #{tpu_custom_call.1} parent=1 // pred_fallthru
      _
    // Predicated region
    $region10: #{tpu_custom_call.1} parent=1 // pred_check
      _
    $region11: #{tpu_custom_call.1} parent=1 // pred_check_branch
      %38 = sbr.rel (0) target = $region13
    $region12: #{tpu_custom_call.1} parent=1 // pred_region
      _
    $region13: #{tpu_custom_call.1} parent=1 // pred_fallthru
      _
    // Predicated region
    $region14: #{tpu_custom_call.1} parent=1 // pred_check
      _
    $region15: #{tpu_custom_call.1} parent=1 // pred_check_branch
      %40 = sbr.rel (0) target = $region17
    $region16: #{tpu_custom_call.1} parent=1 // pred_region
      %s42 = ssub.s32 2048, 2048
      %43 = vsyncadd [#allocation7], %s42
      %s44 = sshll.u32 [#allocation8], 4
      %s45 = int_to_ptr.vmem [resolvable:$true] %s44
      %50 = dma.hbm_to_vmem [thread:$0]  %s3, 2048, %s45, [#allocation7], 128, 128, 8
    $region17: #{tpu_custom_call.1} parent=1 // pred_fallthru
      _
    // Predicated region
    $region18: #{tpu_custom_call.1} parent=1 // pred_check
      _
    $region19: #{tpu_custom_call.1} parent=1 // pred_check_branch
      %52 = sbr.rel (0) target = $region21
    $region20: #{tpu_custom_call.1} parent=1 // pred_region
      _
    $region21: #{tpu_custom_call.1} parent=1 // pred_fallthru
      _
    // Predicated region
    $region22: #{tpu_custom_call.1} parent=1 // pred_check
      _
    $region23: #{tpu_custom_call.1} parent=1 // pred_check_branch
      %54 = sbr.rel (0) target = $region25
    $region24: #{tpu_custom_call.1} parent=1 // pred_region
      %55 = dma.done [#allocation4], 1024
    $region25: #{tpu_custom_call.1} parent=1 // pred_fallthru
      _
    // Predicated region
    $region26: #{tpu_custom_call.1} parent=1 // pred_check
      _
    $region27: #{tpu_custom_call.1} parent=1 // pred_check_branch
      %57 = sbr.rel (0) target = $region29
    $region28: #{tpu_custom_call.1} parent=1 // pred_region
      %58 = dma.done [#allocation7], 16384
    $region29: #{tpu_custom_call.1} parent=1 // pred_fallthru
      _
    // Predicated region
    $region30: #{tpu_custom_call.1} parent=1 // pred_check
      _
    $region31: #{tpu_custom_call.1} parent=1 // pred_check_branch
      %60 = sbr.rel (0) target = $region33
    $region32: #{tpu_custom_call.1} parent=1 // pred_region
      %61 = dma.done [#allocation7], 2048
    $region33: #{tpu_custom_call.1} parent=1 // pred_fallthru
      _
    %p62 = scmp.eq.s32.totalorder 0, 0
    // Predicated region
    $region34: #{tpu_custom_call.1} parent=1 // pred_check
      %p63 = pneg %p62
    $region35: #{tpu_custom_call.1} parent=1 // pred_check_branch
      %65 = sbr.rel (%p63) target = $region37
    $region36: #{tpu_custom_call.1} parent=1 // pred_region
      %66 = vst [vmem:[#allocation2] sm:$0xff] 0.0
    $region37: #{tpu_custom_call.1} parent=1 // pred_fallthru
      _
    %v67 = vld [vmem:[#allocation2] sm:$0xff]
    %v68 = vld [vmem:[#allocation3] sm:$0xff]
    %v69 = vld [vmem:[#allocation3 + $0x8] sm:$0xff]
    %v70 = vld [vmem:[#allocation3 + $0x10] sm:$0xff]
    %v71 = vld [vmem:[#allocation3 + $0x18] sm:$0xff]
    %v72 = vld [vmem:[#allocation3 + $0x20] sm:$0xff]
    %v73 = vld [vmem:[#allocation3 + $0x28] sm:$0xff]
    %v74 = vld [vmem:[#allocation3 + $0x30] sm:$0xff]
    %v75 = vld [vmem:[#allocation3 + $0x38] sm:$0xff]
    %v76 = vld [vmem:[#allocation6] sm:$0xff]
    %v77 = vld [vmem:[#allocation6 + $0x8] sm:$0xff]
    %v78 = vld [vmem:[#allocation6 + $0x10] sm:$0xff]
    %v79 = vld [vmem:[#allocation6 + $0x18] sm:$0xff]
    %v80 = vld [vmem:[#allocation6 + $0x20] sm:$0xff]
    %v81 = vld [vmem:[#allocation6 + $0x28] sm:$0xff]
    %v82 = vld [vmem:[#allocation6 + $0x30] sm:$0xff]
    %v83 = vld [vmem:[#allocation6 + $0x38] sm:$0xff]
    %v84 = vld [vmem:[#allocation6 + $0x40] sm:$0xff]
    %v85 = vld [vmem:[#allocation6 + $0x48] sm:$0xff]
    %v86 = vld [vmem:[#allocation6 + $0x50] sm:$0xff]
    %v87 = vld [vmem:[#allocation6 + $0x58] sm:$0xff]
    %v88 = vld [vmem:[#allocation6 + $0x60] sm:$0xff]
    %v89 = vld [vmem:[#allocation6 + $0x68] sm:$0xff]
    %v90 = vld [vmem:[#allocation6 + $0x70] sm:$0xff]
    %v91 = vld [vmem:[#allocation6 + $0x78] sm:$0xff]
    %v92 = vld [vmem:[#allocation6 + $0x80] sm:$0xff]
    %v93 = vld [vmem:[#allocation6 + $0x88] sm:$0xff]
    %v94 = vld [vmem:[#allocation6 + $0x90] sm:$0xff]
    %v95 = vld [vmem:[#allocation6 + $0x98] sm:$0xff]
    %v96 = vld [vmem:[#allocation6 + $0xa0] sm:$0xff]
    %v97 = vld [vmem:[#allocation6 + $0xa8] sm:$0xff]
    %v98 = vld [vmem:[#allocation6 + $0xb0] sm:$0xff]
    %v99 = vld [vmem:[#allocation6 + $0xb8] sm:$0xff]
    %v100 = vld [vmem:[#allocation6 + $0xc0] sm:$0xff]
    %v101 = vld [vmem:[#allocation6 + $0xc8] sm:$0xff]
    %v102 = vld [vmem:[#allocation6 + $0xd0] sm:$0xff]
    %v103 = vld [vmem:[#allocation6 + $0xd8] sm:$0xff]
    %v104 = vld [vmem:[#allocation6 + $0xe0] sm:$0xff]
    %v105 = vld [vmem:[#allocation6 + $0xe8] sm:$0xff]
    %v106 = vld [vmem:[#allocation6 + $0xf0] sm:$0xff]
    %v107 = vld [vmem:[#allocation6 + $0xf8] sm:$0xff]
    %v108 = vld [vmem:[#allocation6 + $0x100] sm:$0xff]
    %v109 = vld [vmem:[#allocation6 + $0x108] sm:$0xff]
    %v110 = vld [vmem:[#allocation6 + $0x110] sm:$0xff]
    %v111 = vld [vmem:[#allocation6 + $0x118] sm:$0xff]
    %v112 = vld [vmem:[#allocation6 + $0x120] sm:$0xff]
    %v113 = vld [vmem:[#allocation6 + $0x128] sm:$0xff]
    %v114 = vld [vmem:[#allocation6 + $0x130] sm:$0xff]
    %v115 = vld [vmem:[#allocation6 + $0x138] sm:$0xff]
    %v116 = vld [vmem:[#allocation6 + $0x140] sm:$0xff]
    %v117 = vld [vmem:[#allocation6 + $0x148] sm:$0xff]
    %v118 = vld [vmem:[#allocation6 + $0x150] sm:$0xff]
    %v119 = vld [vmem:[#allocation6 + $0x158] sm:$0xff]
    %v120 = vld [vmem:[#allocation6 + $0x160] sm:$0xff]
    %v121 = vld [vmem:[#allocation6 + $0x168] sm:$0xff]
    %v122 = vld [vmem:[#allocation6 + $0x170] sm:$0xff]
    %v123 = vld [vmem:[#allocation6 + $0x178] sm:$0xff]
    %v124 = vld [vmem:[#allocation6 + $0x180] sm:$0xff]
    %v125 = vld [vmem:[#allocation6 + $0x188] sm:$0xff]
    %v126 = vld [vmem:[#allocation6 + $0x190] sm:$0xff]
    %v127 = vld [vmem:[#allocation6 + $0x198] sm:$0xff]
    %v128 = vld [vmem:[#allocation6 + $0x1a0] sm:$0xff]
    %v129 = vld [vmem:[#allocation6 + $0x1a8] sm:$0xff]
    %v130 = vld [vmem:[#allocation6 + $0x1b0] sm:$0xff]
    %v131 = vld [vmem:[#allocation6 + $0x1b8] sm:$0xff]
    %v132 = vld [vmem:[#allocation6 + $0x1c0] sm:$0xff]
    %v133 = vld [vmem:[#allocation6 + $0x1c8] sm:$0xff]
    %v134 = vld [vmem:[#allocation6 + $0x1d0] sm:$0xff]
    %v135 = vld [vmem:[#allocation6 + $0x1d8] sm:$0xff]
    %v136 = vld [vmem:[#allocation6 + $0x1e0] sm:$0xff]
    %v137 = vld [vmem:[#allocation6 + $0x1e8] sm:$0xff]
    %v138 = vld [vmem:[#allocation6 + $0x1f0] sm:$0xff]
    %v139 = vld [vmem:[#allocation6 + $0x1f8] sm:$0xff]
    %v140 = vld [vmem:[#allocation6 + $0x200] sm:$0xff]
    %v141 = vld [vmem:[#allocation6 + $0x208] sm:$0xff]
    %v142 = vld [vmem:[#allocation6 + $0x210] sm:$0xff]
    %v143 = vld [vmem:[#allocation6 + $0x218] sm:$0xff]
    %v144 = vld [vmem:[#allocation6 + $0x220] sm:$0xff]
    %v145 = vld [vmem:[#allocation6 + $0x228] sm:$0xff]
    %v146 = vld [vmem:[#allocation6 + $0x230] sm:$0xff]
    %v147 = vld [vmem:[#allocation6 + $0x238] sm:$0xff]
    %v148 = vld [vmem:[#allocation6 + $0x240] sm:$0xff]
    %v149 = vld [vmem:[#allocation6 + $0x248] sm:$0xff]
    %v150 = vld [vmem:[#allocation6 + $0x250] sm:$0xff]
    %v151 = vld [vmem:[#allocation6 + $0x258] sm:$0xff]
    %v152 = vld [vmem:[#allocation6 + $0x260] sm:$0xff]
    %v153 = vld [vmem:[#allocation6 + $0x268] sm:$0xff]
    %v154 = vld [vmem:[#allocation6 + $0x270] sm:$0xff]
    %v155 = vld [vmem:[#allocation6 + $0x278] sm:$0xff]
    %v156 = vld [vmem:[#allocation6 + $0x280] sm:$0xff]
    %v157 = vld [vmem:[#allocation6 + $0x288] sm:$0xff]
    %v158 = vld [vmem:[#allocation6 + $0x290] sm:$0xff]
    %v159 = vld [vmem:[#allocation6 + $0x298] sm:$0xff]
    %v160 = vld [vmem:[#allocation6 + $0x2a0] sm:$0xff]
    %v161 = vld [vmem:[#allocation6 + $0x2a8] sm:$0xff]
    %v162 = vld [vmem:[#allocation6 + $0x2b0] sm:$0xff]
    %v163 = vld [vmem:[#allocation6 + $0x2b8] sm:$0xff]
    %v164 = vld [vmem:[#allocation6 + $0x2c0] sm:$0xff]
    %v165 = vld [vmem:[#allocation6 + $0x2c8] sm:$0xff]
    %v166 = vld [vmem:[#allocation6 + $0x2d0] sm:$0xff]
    %v167 = vld [vmem:[#allocation6 + $0x2d8] sm:$0xff]
    %v168 = vld [vmem:[#allocation6 + $0x2e0] sm:$0xff]
    %v169 = vld [vmem:[#allocation6 + $0x2e8] sm:$0xff]
    %v170 = vld [vmem:[#allocation6 + $0x2f0] sm:$0xff]
    %v171 = vld [vmem:[#allocation6 + $0x2f8] sm:$0xff]
    %v172 = vld [vmem:[#allocation6 + $0x300] sm:$0xff]
    %v173 = vld [vmem:[#allocation6 + $0x308] sm:$0xff]
    %v174 = vld [vmem:[#allocation6 + $0x310] sm:$0xff]
    %v175 = vld [vmem:[#allocation6 + $0x318] sm:$0xff]
    %v176 = vld [vmem:[#allocation6 + $0x320] sm:$0xff]
    %v177 = vld [vmem:[#allocation6 + $0x328] sm:$0xff]
    %v178 = vld [vmem:[#allocation6 + $0x330] sm:$0xff]
    %v179 = vld [vmem:[#allocation6 + $0x338] sm:$0xff]
    %v180 = vld [vmem:[#allocation6 + $0x340] sm:$0xff]
    %v181 = vld [vmem:[#allocation6 + $0x348] sm:$0xff]
    %v182 = vld [vmem:[#allocation6 + $0x350] sm:$0xff]
    %v183 = vld [vmem:[#allocation6 + $0x358] sm:$0xff]
    %v184 = vld [vmem:[#allocation6 + $0x360] sm:$0xff]
    %v185 = vld [vmem:[#allocation6 + $0x368] sm:$0xff]
    %v186 = vld [vmem:[#allocation6 + $0x370] sm:$0xff]
    %v187 = vld [vmem:[#allocation6 + $0x378] sm:$0xff]
    %v188 = vld [vmem:[#allocation6 + $0x380] sm:$0xff]
    %v189 = vld [vmem:[#allocation6 + $0x388] sm:$0xff]
    %v190 = vld [vmem:[#allocation6 + $0x390] sm:$0xff]
    %v191 = vld [vmem:[#allocation6 + $0x398] sm:$0xff]
    %v192 = vld [vmem:[#allocation6 + $0x3a0] sm:$0xff]
    %v193 = vld [vmem:[#allocation6 + $0x3a8] sm:$0xff]
    %v194 = vld [vmem:[#allocation6 + $0x3b0] sm:$0xff]
    %v195 = vld [vmem:[#allocation6 + $0x3b8] sm:$0xff]
    %v196 = vld [vmem:[#allocation6 + $0x3c0] sm:$0xff]
    %v197 = vld [vmem:[#allocation6 + $0x3c8] sm:$0xff]
    %v198 = vld [vmem:[#allocation6 + $0x3d0] sm:$0xff]
    %v199 = vld [vmem:[#allocation6 + $0x3d8] sm:$0xff]
    %v200 = vld [vmem:[#allocation6 + $0x3e0] sm:$0xff]
    %v201 = vld [vmem:[#allocation6 + $0x3e8] sm:$0xff]
    %v202 = vld [vmem:[#allocation6 + $0x3f0] sm:$0xff]
    %v203 = vld [vmem:[#allocation6 + $0x3f8] sm:$0xff]
    %v212 = vcombine.low %v68, %v70
    %v213 = vcombine.high %v68, %v70
    %v214 = vcombine.low %v72, %v74
    %v215 = vcombine.high %v72, %v74
    %v217 = vunpack.c.l.s4 1983009808
    %v218 = vunpack.c.0.s8 %v217
    %v219 = vlaneseq
    %v220 = vshrl.u32 %v219, 7
    %v221 = vsub.s32 %v218, %v220
    %v222 = vrot.slane %v212, %v221
    %v224 = vunpack.c.l.s4 1983009808
    %v225 = vunpack.c.0.s8 %v224
    %v226 = vlaneseq
    %v227 = vshrl.u32 %v226, 7
    %v228 = vsub.s32 %v225, %v227
    %v229 = vrot.slane %v213, %v228
    %v231 = vunpack.c.l.s4 1983009808
    %v232 = vunpack.c.0.s8 %v231
    %v233 = vlaneseq
    %v234 = vshrl.u32 %v233, 7
    %v235 = vsub.s32 %v232, %v234
    %v236 = vrot.slane %v214, %v235
    %v238 = vunpack.c.l.s4 1983009808
    %v239 = vunpack.c.0.s8 %v238
    %v240 = vlaneseq
    %v241 = vshrl.u32 %v240, 7
    %v242 = vsub.s32 %v239, %v241
    %v243 = vrot.slane %v215, %v242
    %v244 = vcombine.low %v222, %v236
    %v245 = vcombine.high %v222, %v236
    %v246 = vcombine.low %v229, %v243
    %v247 = vcombine.high %v229, %v243
    %v248 = vcombine.low %v69, %v71
    %v249 = vcombine.high %v69, %v71
    %v250 = vcombine.low %v73, %v75
    %v251 = vcombine.high %v73, %v75
    %v253 = vunpack.c.l.s4 1983009808
    %v254 = vunpack.c.0.s8 %v253
    %v255 = vlaneseq
    %v256 = vshrl.u32 %v255, 7
    %v257 = vsub.s32 %v254, %v256
    %v258 = vrot.slane %v248, %v257
    %v260 = vunpack.c.l.s4 1983009808
    %v261 = vunpack.c.0.s8 %v260
    %v262 = vlaneseq
    %v263 = vshrl.u32 %v262, 7
    %v264 = vsub.s32 %v261, %v263
    %v265 = vrot.slane %v249, %v264
    %v267 = vunpack.c.l.s4 1983009808
    %v268 = vunpack.c.0.s8 %v267
    %v269 = vlaneseq
    %v270 = vshrl.u32 %v269, 7
    %v271 = vsub.s32 %v268, %v270
    %v272 = vrot.slane %v250, %v271
    %v274 = vunpack.c.l.s4 1983009808
    %v275 = vunpack.c.0.s8 %v274
    %v276 = vlaneseq
    %v277 = vshrl.u32 %v276, 7
    %v278 = vsub.s32 %v275, %v277
    %v279 = vrot.slane %v251, %v278
    %v280 = vcombine.low %v258, %v272
    %v281 = vcombine.high %v258, %v272
    %v282 = vcombine.low %v265, %v279
    %v283 = vcombine.high %v265, %v279
    %292 = vmatprep.subr.mxu0 0.0
    %293 = vmatpush1.msra.mxu0 %v76
    %294 = vmatprep.subr.mxu0 0.0
    %295 = vmatpush1.msra.mxu0 %v77
    %296 = vmatprep.subr.mxu0 0.0
    %297 = vmatpush1.msra.mxu0 %v78
    %298 = vmatprep.subr.mxu0 0.0
    %299 = vmatpush1.msra.mxu0 %v79
    %300 = vmatprep.subr.mxu0 0.0
    %301 = vmatpush1.msra.mxu0 %v80
    %302 = vmatprep.subr.mxu0 0.0
    %303 = vmatpush1.msra.mxu0 %v81
    %304 = vmatprep.subr.mxu0 0.0
    %305 = vmatpush1.msra.mxu0 %v82
    %306 = vmatprep.subr.mxu0 0.0
    %307 = vmatpush1.msra.mxu0 %v83
    %308 = vmatprep.subr.mxu0 0.0
    %309 = vmatpush1.msra.mxu0 %v84
    %310 = vmatprep.subr.mxu0 0.0
    %311 = vmatpush1.msra.mxu0 %v85
    %312 = vmatprep.subr.mxu0 0.0
    %313 = vmatpush1.msra.mxu0 %v86
    %314 = vmatprep.subr.mxu0 0.0
    %315 = vmatpush1.msra.mxu0 %v87
    %316 = vmatprep.subr.mxu0 0.0
    %317 = vmatpush1.msra.mxu0 %v88
    %318 = vmatprep.subr.mxu0 0.0
    %319 = vmatpush1.msra.mxu0 %v89
    %320 = vmatprep.subr.mxu0 0.0
    %321 = vmatpush1.msra.mxu0 %v90
    %322 = vmatprep.subr.mxu0 0.0
    %323 = vmatpush1.msra.mxu0 %v91
    %324 = vmatprep.subr.mxu0 0.0
    %325 = vmatpush1.msra.mxu0 %v92
    %326 = vmatprep.subr.mxu0 0.0
    %327 = vmatpush1.msra.mxu0 %v93
    %328 = vmatprep.subr.mxu0 0.0
    %329 = vmatpush1.msra.mxu0 %v94
    %330 = vmatprep.subr.mxu0 0.0
    %331 = vmatpush1.msra.mxu0 %v95
    %332 = vmatprep.subr.mxu0 0.0
    %333 = vmatpush1.msra.mxu0 %v96
    %334 = vmatprep.subr.mxu0 0.0
    %335 = vmatpush1.msra.mxu0 %v97
    %336 = vmatprep.subr.mxu0 0.0
    %337 = vmatpush1.msra.mxu0 %v98
    %338 = vmatprep.subr.mxu0 0.0
    %339 = vmatpush1.msra.mxu0 %v99
    %340 = vmatprep.subr.mxu0 0.0
    %341 = vmatpush1.msra.mxu0 %v100
    %342 = vmatprep.subr.mxu0 0.0
    %343 = vmatpush1.msra.mxu0 %v101
    %344 = vmatprep.subr.mxu0 0.0
    %345 = vmatpush1.msra.mxu0 %v102
    %346 = vmatprep.subr.mxu0 0.0
    %347 = vmatpush1.msra.mxu0 %v103
    %348 = vmatprep.subr.mxu0 0.0
    %349 = vmatpush1.msra.mxu0 %v104
    %350 = vmatprep.subr.mxu0 0.0
    %351 = vmatpush1.msra.mxu0 %v105
    %352 = vmatprep.subr.mxu0 0.0
    %353 = vmatpush1.msra.mxu0 %v106
    %354 = vmatprep.subr.mxu0 0.0
    %355 = vmatpush1.msra.mxu0 %v107
    %356 = vmatprep.mubr.f32.mxu0 %v245
    %357 = vmatmul.mubr.f32.gmra.mrb[0].mxu0 %v244
    %v358 = vpop.f32.mrb[0].mxu0
    %v359 = vadd.f32 0.0, %v358
    %v360 = vpop.f32.mrb[0].mxu0
    %361 = vdwg.mxu0
    %362 = vmatprep.subr.mxu0 0.0
    %363 = vmatpush1.msra.mxu0 %v108
    %364 = vmatprep.subr.mxu0 0.0
    %365 = vmatpush1.msra.mxu0 %v109
    %366 = vmatprep.subr.mxu0 0.0
    %367 = vmatpush1.msra.mxu0 %v110
    %368 = vmatprep.subr.mxu0 0.0
    %369 = vmatpush1.msra.mxu0 %v111
    %370 = vmatprep.subr.mxu0 0.0
    %371 = vmatpush1.msra.mxu0 %v112
    %372 = vmatprep.subr.mxu0 0.0
    %373 = vmatpush1.msra.mxu0 %v113
    %374 = vmatprep.subr.mxu0 0.0
    %375 = vmatpush1.msra.mxu0 %v114
    %376 = vmatprep.subr.mxu0 0.0
    %377 = vmatpush1.msra.mxu0 %v115
    %378 = vmatprep.subr.mxu0 0.0
    %379 = vmatpush1.msra.mxu0 %v116
    %380 = vmatprep.subr.mxu0 0.0
    %381 = vmatpush1.msra.mxu0 %v117
    %382 = vmatprep.subr.mxu0 0.0
    %383 = vmatpush1.msra.mxu0 %v118
    %384 = vmatprep.subr.mxu0 0.0
    %385 = vmatpush1.msra.mxu0 %v119
    %386 = vmatprep.subr.mxu0 0.0
    %387 = vmatpush1.msra.mxu0 %v120
    %388 = vmatprep.subr.mxu0 0.0
    %389 = vmatpush1.msra.mxu0 %v121
    %390 = vmatprep.subr.mxu0 0.0
    %391 = vmatpush1.msra.mxu0 %v122
    %392 = vmatprep.subr.mxu0 0.0
    %393 = vmatpush1.msra.mxu0 %v123
    %394 = vmatprep.subr.mxu0 0.0
    %395 = vmatpush1.msra.mxu0 %v124
    %396 = vmatprep.subr.mxu0 0.0
    %397 = vmatpush1.msra.mxu0 %v125
    %398 = vmatprep.subr.mxu0 0.0
    %399 = vmatpush1.msra.mxu0 %v126
    %400 = vmatprep.subr.mxu0 0.0
    %401 = vmatpush1.msra.mxu0 %v127
    %402 = vmatprep.subr.mxu0 0.0
    %403 = vmatpush1.msra.mxu0 %v128
    %404 = vmatprep.subr.mxu0 0.0
    %405 = vmatpush1.msra.mxu0 %v129
    %406 = vmatprep.subr.mxu0 0.0
    %407 = vmatpush1.msra.mxu0 %v130
    %408 = vmatprep.subr.mxu0 0.0
    %409 = vmatpush1.msra.mxu0 %v131
    %410 = vmatprep.subr.mxu0 0.0
    %411 = vmatpush1.msra.mxu0 %v132
    %412 = vmatprep.subr.mxu0 0.0
    %413 = vmatpush1.msra.mxu0 %v133
    %414 = vmatprep.subr.mxu0 0.0
    %415 = vmatpush1.msra.mxu0 %v134
    %416 = vmatprep.subr.mxu0 0.0
    %417 = vmatpush1.msra.mxu0 %v135
    %418 = vmatprep.subr.mxu0 0.0
    %419 = vmatpush1.msra.mxu0 %v136
    %420 = vmatprep.subr.mxu0 0.0
    %421 = vmatpush1.msra.mxu0 %v137
    %422 = vmatprep.subr.mxu0 0.0
    %423 = vmatpush1.msra.mxu0 %v138
    %424 = vmatprep.subr.mxu0 0.0
    %425 = vmatpush1.msra.mxu0 %v139
    %426 = vmatprep.mubr.f32.mxu0 %v247
    %427 = vmatmul.mubr.f32.gmra.mrb[0].mxu0 %v246
    %v428 = vpop.f32.mrb[0].mxu0
    %v429 = vadd.f32 %v359, %v428
    %v430 = vpop.f32.mrb[0].mxu0
    %431 = vdwg.mxu0
    %432 = vmatprep.subr.mxu0 0.0
    %433 = vmatpush1.msra.mxu0 %v140
    %434 = vmatprep.subr.mxu0 0.0
    %435 = vmatpush1.msra.mxu0 %v141
    %436 = vmatprep.subr.mxu0 0.0
    %437 = vmatpush1.msra.mxu0 %v142
    %438 = vmatprep.subr.mxu0 0.0
    %439 = vmatpush1.msra.mxu0 %v143
    %440 = vmatprep.subr.mxu0 0.0
    %441 = vmatpush1.msra.mxu0 %v144
    %442 = vmatprep.subr.mxu0 0.0
    %443 = vmatpush1.msra.mxu0 %v145
    %444 = vmatprep.subr.mxu0 0.0
    %445 = vmatpush1.msra.mxu0 %v146
    %446 = vmatprep.subr.mxu0 0.0
    %447 = vmatpush1.msra.mxu0 %v147
    %448 = vmatprep.subr.mxu0 0.0
    %449 = vmatpush1.msra.mxu0 %v148
    %450 = vmatprep.subr.mxu0 0.0
    %451 = vmatpush1.msra.mxu0 %v149
    %452 = vmatprep.subr.mxu0 0.0
    %453 = vmatpush1.msra.mxu0 %v150
    %454 = vmatprep.subr.mxu0 0.0
    %455 = vmatpush1.msra.mxu0 %v151
    %456 = vmatprep.subr.mxu0 0.0
    %457 = vmatpush1.msra.mxu0 %v152
    %458 = vmatprep.subr.mxu0 0.0
    %459 = vmatpush1.msra.mxu0 %v153
    %460 = vmatprep.subr.mxu0 0.0
    %461 = vmatpush1.msra.mxu0 %v154
    %462 = vmatprep.subr.mxu0 0.0
    %463 = vmatpush1.msra.mxu0 %v155
    %464 = vmatprep.subr.mxu0 0.0
    %465 = vmatpush1.msra.mxu0 %v156
    %466 = vmatprep.subr.mxu0 0.0
    %467 = vmatpush1.msra.mxu0 %v157
    %468 = vmatprep.subr.mxu0 0.0
    %469 = vmatpush1.msra.mxu0 %v158
    %470 = vmatprep.subr.mxu0 0.0
    %471 = vmatpush1.msra.mxu0 %v159
    %472 = vmatprep.subr.mxu0 0.0
    %473 = vmatpush1.msra.mxu0 %v160
    %474 = vmatprep.subr.mxu0 0.0
    %475 = vmatpush1.msra.mxu0 %v161
    %476 = vmatprep.subr.mxu0 0.0
    %477 = vmatpush1.msra.mxu0 %v162
    %478 = vmatprep.subr.mxu0 0.0
    %479 = vmatpush1.msra.mxu0 %v163
    %480 = vmatprep.subr.mxu0 0.0
    %481 = vmatpush1.msra.mxu0 %v164
    %482 = vmatprep.subr.mxu0 0.0
    %483 = vmatpush1.msra.mxu0 %v165
    %484 = vmatprep.subr.mxu0 0.0
    %485 = vmatpush1.msra.mxu0 %v166
    %486 = vmatprep.subr.mxu0 0.0
    %487 = vmatpush1.msra.mxu0 %v167
    %488 = vmatprep.subr.mxu0 0.0
    %489 = vmatpush1.msra.mxu0 %v168
    %490 = vmatprep.subr.mxu0 0.0
    %491 = vmatpush1.msra.mxu0 %v169
    %492 = vmatprep.subr.mxu0 0.0
    %493 = vmatpush1.msra.mxu0 %v170
    %494 = vmatprep.subr.mxu0 0.0
    %495 = vmatpush1.msra.mxu0 %v171
    %496 = vmatprep.mubr.f32.mxu0 %v281
    %497 = vmatmul.mubr.f32.gmra.mrb[0].mxu0 %v280
    %v498 = vpop.f32.mrb[0].mxu0
    %v499 = vadd.f32 %v429, %v498
    %v500 = vpop.f32.mrb[0].mxu0
    %501 = vdwg.mxu0
    %502 = vmatprep.subr.mxu0 0.0
    %503 = vmatpush1.msra.mxu0 %v172
    %504 = vmatprep.subr.mxu0 0.0
    %505 = vmatpush1.msra.mxu0 %v173
    %506 = vmatprep.subr.mxu0 0.0
    %507 = vmatpush1.msra.mxu0 %v174
    %508 = vmatprep.subr.mxu0 0.0
    %509 = vmatpush1.msra.mxu0 %v175
    %510 = vmatprep.subr.mxu0 0.0
    %511 = vmatpush1.msra.mxu0 %v176
    %512 = vmatprep.subr.mxu0 0.0
    %513 = vmatpush1.msra.mxu0 %v177
    %514 = vmatprep.subr.mxu0 0.0
    %515 = vmatpush1.msra.mxu0 %v178
    %516 = vmatprep.subr.mxu0 0.0
    %517 = vmatpush1.msra.mxu0 %v179
    %518 = vmatprep.subr.mxu0 0.0
    %519 = vmatpush1.msra.mxu0 %v180
    %520 = vmatprep.subr.mxu0 0.0
    %521 = vmatpush1.msra.mxu0 %v181
    %522 = vmatprep.subr.mxu0 0.0
    %523 = vmatpush1.msra.mxu0 %v182
    %524 = vmatprep.subr.mxu0 0.0
    %525 = vmatpush1.msra.mxu0 %v183
    %526 = vmatprep.subr.mxu0 0.0
    %527 = vmatpush1.msra.mxu0 %v184
    %528 = vmatprep.subr.mxu0 0.0
    %529 = vmatpush1.msra.mxu0 %v185
    %530 = vmatprep.subr.mxu0 0.0
    %531 = vmatpush1.msra.mxu0 %v186
    %532 = vmatprep.subr.mxu0 0.0
    %533 = vmatpush1.msra.mxu0 %v187
    %534 = vmatprep.subr.mxu0 0.0
    %535 = vmatpush1.msra.mxu0 %v188
    %536 = vmatprep.subr.mxu0 0.0
    %537 = vmatpush1.msra.mxu0 %v189
    %538 = vmatprep.subr.mxu0 0.0
    %539 = vmatpush1.msra.mxu0 %v190
    %540 = vmatprep.subr.mxu0 0.0
    %541 = vmatpush1.msra.mxu0 %v191
    %542 = vmatprep.subr.mxu0 0.0
    %543 = vmatpush1.msra.mxu0 %v192
    %544 = vmatprep.subr.mxu0 0.0
    %545 = vmatpush1.msra.mxu0 %v193
    %546 = vmatprep.subr.mxu0 0.0
    %547 = vmatpush1.msra.mxu0 %v194
    %548 = vmatprep.subr.mxu0 0.0
    %549 = vmatpush1.msra.mxu0 %v195
    %550 = vmatprep.subr.mxu0 0.0
    %551 = vmatpush1.msra.mxu0 %v196
    %552 = vmatprep.subr.mxu0 0.0
    %553 = vmatpush1.msra.mxu0 %v197
    %554 = vmatprep.subr.mxu0 0.0
    %555 = vmatpush1.msra.mxu0 %v198
    %556 = vmatprep.subr.mxu0 0.0
    %557 = vmatpush1.msra.mxu0 %v199
    %558 = vmatprep.subr.mxu0 0.0
    %559 = vmatpush1.msra.mxu0 %v200
    %560 = vmatprep.subr.mxu0 0.0
    %561 = vmatpush1.msra.mxu0 %v201
    %562 = vmatprep.subr.mxu0 0.0
    %563 = vmatpush1.msra.mxu0 %v202
    %564 = vmatprep.subr.mxu0 0.0
    %565 = vmatpush1.msra.mxu0 %v203
    %566 = vmatprep.mubr.f32.mxu0 %v283
    %567 = vmatmul.mubr.f32.gmra.mrb[0].mxu0 %v282
    %v568 = vpop.f32.mrb[0].mxu0
    %v569 = vadd.f32 %v499, %v568
    %v570 = vpop.f32.mrb[0].mxu0
    %571 = vdwg.mxu0
    %v572 = vadd.f32 %v67, %v569
    %573 = vst [vmem:[#allocation2] sm:$0xff] %v572
    // Predicated region
    $region38: #{tpu_custom_call.1} parent=1 // pred_check
      %p574 = pneg %p62
    $region39: #{tpu_custom_call.1} parent=1 // pred_check_branch
      %576 = sbr.rel (%p574) target = $region41
    $region40: #{tpu_custom_call.1} parent=1 // pred_region
      %v577 = vld [vmem:[#allocation2] sm:$0xff]
      %v578 = vld [vmem:[%s2] sm:$0x1]
      %v580 = vlaneseq
      %v581 = vshrl.u32 %v580, 7
      %v582 = vsub.s32 0, %v581
      %v583 = vrot.slane %v578, %v582
      %v585 = vadd.f32 %v577, %v583
      %v586 = vmul.f32 %v585, %v585
      %v587 = vld [vmem:[#allocation8] sm:$0xff]
      %v588 = vld [vmem:[#allocation8 + $0x8] sm:$0xff]
      %v589 = vld [vmem:[#allocation8 + $0x10] sm:$0xff]
      %v590 = vld [vmem:[#allocation8 + $0x18] sm:$0xff]
      %v591 = vld [vmem:[#allocation8 + $0x20] sm:$0xff]
      %v592 = vld [vmem:[#allocation8 + $0x28] sm:$0xff]
      %v593 = vld [vmem:[#allocation8 + $0x30] sm:$0xff]
      %v594 = vld [vmem:[#allocation8 + $0x38] sm:$0xff]
      %v595 = vld [vmem:[#allocation8 + $0x40] sm:$0xff]
      %v596 = vld [vmem:[#allocation8 + $0x48] sm:$0xff]
      %v597 = vld [vmem:[#allocation8 + $0x50] sm:$0xff]
      %v598 = vld [vmem:[#allocation8 + $0x58] sm:$0xff]
      %v599 = vld [vmem:[#allocation8 + $0x60] sm:$0xff]
      %v600 = vld [vmem:[#allocation8 + $0x68] sm:$0xff]
      %v601 = vld [vmem:[#allocation8 + $0x70] sm:$0xff]
      %v602 = vld [vmem:[#allocation8 + $0x78] sm:$0xff]
      %v603 = vld [vmem:[%s4] sm:$0x1]
      %v605 = vlaneseq
      %v606 = vshrl.u32 %v605, 7
      %v607 = vsub.s32 0, %v606
      %v608 = vrot.slane %v603, %v607
      %610 = vmatprep.subr.mxu0 0.0
      %611 = vmatpush1.msra.mxu0 %v587
      %612 = vmatprep.subr.mxu0 0.0
      %613 = vmatpush1.msra.mxu0 %v588
      %614 = vmatprep.subr.mxu0 0.0
      %615 = vmatpush1.msra.mxu0 %v589
      %616 = vmatprep.subr.mxu0 0.0
      %617 = vmatpush1.msra.mxu0 %v590
      %618 = vmatprep.subr.mxu0 0.0
      %619 = vmatpush1.msra.mxu0 %v591
      %620 = vmatprep.subr.mxu0 0.0
      %621 = vmatpush1.msra.mxu0 %v592
      %622 = vmatprep.subr.mxu0 0.0
      %623 = vmatpush1.msra.mxu0 %v593
      %624 = vmatprep.subr.mxu0 0.0
      %625 = vmatpush1.msra.mxu0 %v594
      %626 = vmatprep.subr.mxu0 0.0
      %627 = vmatpush1.msra.mxu0 %v595
      %628 = vmatprep.subr.mxu0 0.0
      %629 = vmatpush1.msra.mxu0 %v596
      %630 = vmatprep.subr.mxu0 0.0
      %631 = vmatpush1.msra.mxu0 %v597
      %632 = vmatprep.subr.mxu0 0.0
      %633 = vmatpush1.msra.mxu0 %v598
      %634 = vmatprep.subr.mxu0 0.0
      %635 = vmatpush1.msra.mxu0 %v599
      %636 = vmatprep.subr.mxu0 0.0
      %637 = vmatpush1.msra.mxu0 %v600
      %638 = vmatprep.subr.mxu0 0.0
      %639 = vmatpush1.msra.mxu0 %v601
      %640 = vmatprep.subr.mxu0 0.0
      %641 = vmatpush1.msra.mxu0 %v602
      %642 = vmatprep.subr.mxu0 0.0
      %643 = vmatpush1.msra.mxu0 0.0
      %644 = vmatprep.subr.mxu0 0.0
      %645 = vmatpush1.msra.mxu0 0.0
      %646 = vmatprep.subr.mxu0 0.0
      %647 = vmatpush1.msra.mxu0 0.0
      %648 = vmatprep.subr.mxu0 0.0
      %649 = vmatpush1.msra.mxu0 0.0
      %650 = vmatprep.subr.mxu0 0.0
      %651 = vmatpush1.msra.mxu0 0.0
      %652 = vmatprep.subr.mxu0 0.0
      %653 = vmatpush1.msra.mxu0 0.0
      %654 = vmatprep.subr.mxu0 0.0
      %655 = vmatpush1.msra.mxu0 0.0
      %656 = vmatprep.subr.mxu0 0.0
      %657 = vmatpush1.msra.mxu0 0.0
      %658 = vmatprep.subr.mxu0 0.0
      %659 = vmatpush1.msra.mxu0 0.0
      %660 = vmatprep.subr.mxu0 0.0
      %661 = vmatpush1.msra.mxu0 0.0
      %662 = vmatprep.subr.mxu0 0.0
      %663 = vmatpush1.msra.mxu0 0.0
      %664 = vmatprep.subr.mxu0 0.0
      %665 = vmatpush1.msra.mxu0 0.0
      %666 = vmatprep.subr.mxu0 0.0
      %667 = vmatpush1.msra.mxu0 0.0
      %668 = vmatprep.subr.mxu0 0.0
      %669 = vmatpush1.msra.mxu0 0.0
      %670 = vmatprep.subr.mxu0 0.0
      %671 = vmatpush1.msra.mxu0 0.0
      %672 = vmatprep.subr.mxu0 0.0
      %673 = vmatpush1.msra.mxu0 0.0
      %674 = vmatprep.mubr.f32.mxu0 0.0
      %675 = vmatmul.mubr.f32.gmra.mrb[0].mxu0 %v586
      %v676 = vpop.f32.mrb[0].mxu0
      %v677 = vadd.f32 %v608, %v676
      %v678 = vpop.f32.mrb[0].mxu0
      %679 = vdwg.mxu0
      %680 = vst [vmem:[#allocation9] sm:$0xff] %v677
    $region41: #{tpu_custom_call.1} parent=1 // pred_fallthru
      _
    // Predicated region
    $region42: #{tpu_custom_call.1} parent=1 // pred_check
      _
    $region43: #{tpu_custom_call.1} parent=1 // pred_check_branch
      %682 = sbr.rel (0) target = $region45
    $region44: #{tpu_custom_call.1} parent=1 // pred_region
      %s684 = ssub.s32 128, 32
      %685 = vsyncadd [#allocation5], %s684
      %s686 = sshll.u32 [#allocation9], 4
      %s687 = int_to_ptr.vmem [resolvable:$true] %s686
      %692 = dma.vmem_to_hbm [thread:$0]  %s687, 32, %s5, [#allocation5], 32, 32, 2
    $region45: #{tpu_custom_call.1} parent=1 // pred_fallthru
      _
    // Predicated region
    $region46: #{tpu_custom_call.1} parent=1 // pred_check
      _
    $region47: #{tpu_custom_call.1} parent=1 // pred_check_branch
      %694 = sbr.rel (0) target = $region49
    $region48: #{tpu_custom_call.1} parent=1 // pred_region
      %695 = dma.done [#allocation5], 128
    $region49: #{tpu_custom_call.1} parent=1 // pred_fallthru
      _
    %696 = vsyncpa [#allocation4], 1
    %697 = vsyncpa [#allocation7], 1
    %698 = vsyncpa [#allocation5], 1

</llo_original>
